<compile_context>
chip_gen: v5e
topology: v5e:2x2
jax: 0.10.0
libtpu: 0.0.40
codegen_flags: <defaults>
</compile_context>

<pallas_src>
import math

import jax
import jax.numpy as jnp
from jax.experimental import pallas as pl
from jax.experimental.pallas import tpu as pltpu


# ----------------------------- Pallas kernel ------------------------------- #
def _make_kernel(C, L):
    """Kernel closure over the channel count C and sequence length L."""

    def shuffle_conv_kernel(x_ref, wstk_ref, w2_ref, prm_ref, o_ref):
        x = x_ref[...]              # (TN, C)  token-major input tile (residual)
        Wstk = wstk_ref[...]        # (2C, C)  [a1-scaled shuffled gconv1 ; identity]
        W2 = w2_ref[...]            # (C, C)   a3-scaled block-diagonal gconv2
        p = prm_ref[...]            # (C, 6)   additive BN folds + scaled dw taps

        c1 = p[:, 0:1]
        wl = p[:, 1:2]
        wm = p[:, 2:3]
        wr = p[:, 3:4]
        c2 = p[:, 4:5]
        c3 = p[:, 5:6]

        tn = x.shape[0]

        # One MXU pass: contract x's channel axis ("NT" matmul) so both the
        # gconv1 output (rows 0..C-1, already BN1-scaled & shuffle-permuted) and
        # the channels-major residual x^T (identity rows C..2C-1) come out
        # lane-dense with no transpose op.
        z = jax.lax.dot_general(Wstk, x, (((1,), (1,)), ((), ())),
                                preferred_element_type=jnp.float32)    # (2C, TN)
        z1 = z[:C, :]
        xT = z[C:, :]

        h = jnp.maximum(z1 + c1, 0.0)                                  # BN1 shift + ReLU

        # Depthwise k=3 conv (pad=1) along tokens: two non-negative lane rolls
        # (XLU slot) plus in-kernel boundary masks.  Tile starts are multiples
        # of L, so iota % L is the within-sequence position; the masks also stop
        # cross-sequence leakage now that several sequences share one lane tile.
        pos = jax.lax.broadcasted_iota(jnp.int32, (C, tn), 1) % L
        h_prev = jnp.where(pos != 0, pltpu.roll(h, shift=1, axis=1), 0.0)
        h_next = jnp.where(pos != L - 1, pltpu.roll(h, shift=tn - 1, axis=1), 0.0)
        h = wl * h_prev + wm * h + wr * h_next + c2                    # dwconv + BN2

        g = jnp.dot(W2, h, preferred_element_type=jnp.float32) + c3    # gconv2 + BN3

        # exact GELU: 0.5*g*(1+erf(g/sqrt(2))); erf via Abramowitz-Stegun 7.1.26
        # (max abs err ~1.5e-7).  Divide kept exact so the 1e-4 check passes.
        u = g * 0.7071067811865476
        au = jnp.abs(u)
        t = 1.0 / (1.0 + 0.3275911 * au)
        poly = ((((1.061405429 * t - 1.453152027) * t + 1.421413741) * t
                 - 0.284496736) * t + 0.254829592) * t
        erf_abs = 1.0 - poly * jnp.exp(-au * au)
        erf_u = jnp.where(u >= 0.0, erf_abs, -erf_abs)
        g = 0.5 * g * (1.0 + erf_u)

        # dropout (eval) is identity; lane-dense (C, TN) residual add + store.
        o_ref[...] = (g + xT).astype(o_ref.dtype)

    return shuffle_conv_kernel


# ------------------------------ host wrapper ------------------------------- #
def _block_diag_from_grouped(w, groups):
    """w: (C, C//groups, 1) grouped conv1d weight -> dense (C, C) block-diagonal."""
    C, cpg, _ = w.shape
    blocks = w[:, :, 0].reshape(groups, cpg, cpg)
    Wf = jnp.zeros((C, C), jnp.float32)
    for g in range(groups):
        Wf = Wf.at[g * cpg:(g + 1) * cpg, g * cpg:(g + 1) * cpg].set(blocks[g])
    return Wf


def _choose_token_tile(N, L, target_steps=2, max_tile=16384):
    """Token tile: multiple of lcm(L, 128) (sequence-aligned & lane-dense) that
    divides N, preferring >= target_steps grid steps (2 feeds both v7x TCs;
    use target_steps=1 on single-TC v5e/v6e).  Falls back to the whole axis."""
    base = L * 128 // math.gcd(L, 128)
    if N % base != 0:
        return N
    divisors = [k * base for k in range(N // base, 0, -1) if N % (k * base) == 0]
    for tile in divisors:                      # largest first
        if tile <= max_tile and N // tile >= target_steps:
            return tile
    for tile in divisors:
        if tile <= max_tile:
            return tile
    return divisors[-1]


def shuffle_conv_forward(x, params, nvars, c_out, *, token_tile=None,
                         target_grid_steps=2):
    """x: (B, L, M, S) with M == nvars, S == c_out.  Returns same shape."""
    B, L, M, S = x.shape
    assert M == nvars and S == c_out
    C = M * S
    N = B * L
    eps = 1e-5

    (w1, b1, g1, be1, m1, v1,
     wdw, bdw, g2, be2, m2, v2,
     w2, b2, g3, be3, m3, v3) = params

    # Fold every (conv bias + BatchNorm) pair into a per-channel affine; push the
    # multiplicative part into the weights, keep only the additive part.
    a1 = g1 / jnp.sqrt(v1 + eps)
    c1 = a1 * (b1 - m1) + be1
    a2 = g2 / jnp.sqrt(v2 + eps)
    c2 = a2 * (bdw - m2) + be2
    a3 = g3 / jnp.sqrt(v3 + eps)
    c3 = a3 * (b2 - m3) + be3

    # channel-shuffle permutation folded into gconv1's rows + BN1 params
    perm = jnp.arange(C).reshape(nvars, c_out).T.reshape(-1)
    W1p = (a1[:, None] * _block_diag_from_grouped(w1, nvars))[perm, :]
    # identity rows stacked below -> one dot_general emits [z1 ; x^T] channels-major
    Wstk = jnp.concatenate([W1p, jnp.eye(C, dtype=jnp.float32)], axis=0)   # (2C, C)
    W2s = a3[:, None] * _block_diag_from_grouped(w2, nvars)                # (C, C)

    wl = a2 * wdw[:, 0, 0]
    wm = a2 * wdw[:, 0, 1]
    wr = a2 * wdw[:, 0, 2]
    prm = jnp.stack([c1[perm], wl, wm, wr, c2, c3], axis=1).astype(jnp.float32)  # (C,6)

    # token-major (B,L,M,S) -> (N, C): pure reshape, no HBM transpose on input.
    x_nc = x.reshape(N, C).astype(jnp.float32)

    if token_tile is None:
        token_tile = _choose_token_tile(N, L, target_steps=target_grid_steps)
    tn = token_tile
    assert N % tn == 0 and tn % L == 0  # tile boundaries == sequence boundaries
    grid = (N // tn,)

    cost = pl.CostEstimate(
        flops=6 * N * C * C + 40 * N * C,      # two small matmuls + elementwise
        transcendentals=N * C,                 # one exp per element (erf)
        bytes_accessed=4 * (2 * N * C + 3 * C * C + 6 * C),
    )

    out_cn = pl.pallas_call(
        _make_kernel(C, L),
        out_shape=jax.ShapeDtypeStruct((C, N), jnp.float32),
        grid=grid,
        in_specs=[
            pl.BlockSpec((tn, C), lambda i: (i, 0)),       # activation tile
            pl.BlockSpec((2 * C, C), lambda i: (0, 0)),    # [a1*W1p ; I]
            pl.BlockSpec((C, C), lambda i: (0, 0)),        # a3*W2
            pl.BlockSpec((C, 6), lambda i: (0, 0)),        # additive folds + dw taps
        ],
        out_specs=pl.BlockSpec((C, tn), lambda i: (0, i)),  # lane-dense store
        compiler_params=pltpu.CompilerParams(dimension_semantics=("parallel",)),
        cost_estimate=cost,
    )(x_nc, Wstk.astype(jnp.float32), W2s.astype(jnp.float32), prm)

    # channels-major -> token-major relayout handled by XLA outside the kernel
    return out_cn.T.reshape(B, L, M, S)


# --------------------------- pure-JAX reference ---------------------------- #
def reference_forward(x, params, nvars, c_out):
    B, L, M, S = x.shape
    C = M * S
    eps = 1e-5
    (w1, b1, g1, be1, m1, v1,
     wdw, bdw, g2, be2, m2, v2,
     w2, b2, g3, be3, m3, v3) = params

    def grouped_conv1x1(h, w, b, groups):
        cpg = C // groups
        hg = h.reshape(B, groups, cpg, L)
        wg = w[:, :, 0].reshape(groups, cpg, cpg)
        out = jnp.einsum('bgil,goi->bgol', hg, wg).reshape(B, C, L)
        return out + b[None, :, None]

    def bn(h, gamma, beta, mean, var):
        return (gamma[None, :, None] * (h - mean[None, :, None])
                / jnp.sqrt(var[None, :, None] + eps) + beta[None, :, None])

    xc = x.reshape(B, L, C).transpose(0, 2, 1)
    residual = xc
    h = grouped_conv1x1(xc, w1, b1, nvars)
    h = jnp.maximum(bn(h, g1, be1, m1, v1), 0.0)
    # channel shuffle
    h = h.reshape(B, nvars, c_out, L).transpose(0, 2, 1, 3).reshape(B, C, L)
    # depthwise conv k=3 pad=1
    hp = jnp.pad(h, ((0, 0), (0, 0), (1, 1)))
    h = (wdw[:, 0, 0][None, :, None] * hp[:, :, :L]
         + wdw[:, 0, 1][None, :, None] * hp[:, :, 1:L + 1]
         + wdw[:, 0, 2][None, :, None] * hp[:, :, 2:L + 2]) + bdw[None, :, None]
    h = bn(h, g2, be2, m2, v2)
    h = grouped_conv1x1(h, w2, b2, nvars)
    h = bn(h, g3, be3, m3, v3)
    h = jax.nn.gelu(h, approximate=False)
    out = h + residual
    return out.transpose(0, 2, 1).reshape(B, L, M, S)


# ---------------------------------- main ----------------------------------- #
if __name__ == "__main__":
    # configs: seq_len=16, c_out=8, nvars=len(source_names)=4; batch chosen so the
    # folded token axis N = B*L = 256 gives two lane-dense 128-token tiles.
    B, L, nvars, c_out = 16, 16, 4, 8
    C = nvars * c_out

    key = jax.random.PRNGKey(0)
    ks = jax.random.split(key, 20)

    # TODO(synk): BatchNorm is implemented in inference mode (running stats) and
    #             Dropout(0.1) is identity (eval mode); training-mode batch stats
    #             / stochastic dropout are not reproduced.
    params = (
        0.2 * jax.random.normal(ks[0], (C, c_out, 1), jnp.float32),   # gconv1 weight
        0.1 * jax.random.normal(ks[1], (C,), jnp.float32),            # gconv1 bias
        1.0 + 0.1 * jax.random.normal(ks[2], (C,), jnp.float32),      # bn1 gamma
        0.1 * jax.random.normal(ks[3], (C,), jnp.float32),            # bn1 beta
        0.1 * jax.random.normal(ks[4], (C,), jnp.float32),            # bn1 running_mean
        1.0 + 0.1 * jnp.abs(jax.random.normal(ks[5], (C,), jnp.float32)),  # bn1 running_var
        0.3 * jax.random.normal(ks[6], (C, 1, 3), jnp.float32),       # dwconv weight
        0.1 * jax.random.normal(ks[7], (C,), jnp.float32),            # dwconv bias
        1.0 + 0.1 * jax.random.normal(ks[8], (C,), jnp.float32),      # bn2 gamma
        0.1 * jax.random.normal(ks[9], (C,), jnp.float32),            # bn2 beta
        0.1 * jax.random.normal(ks[10], (C,), jnp.float32),           # bn2 running_mean
        1.0 + 0.1 * jnp.abs(jax.random.normal(ks[11], (C,), jnp.float32)),  # bn2 running_var
        0.2 * jax.random.normal(ks[12], (C, c_out, 1), jnp.float32),  # gconv2 weight
        0.1 * jax.random.normal(ks[13], (C,), jnp.float32),           # gconv2 bias
        1.0 + 0.1 * jax.random.normal(ks[14], (C,), jnp.float32),     # bn3 gamma
        0.1 * jax.random.normal(ks[15], (C,), jnp.float32),           # bn3 beta
        0.1 * jax.random.normal(ks[16], (C,), jnp.float32),           # bn3 running_mean
        1.0 + 0.1 * jnp.abs(jax.random.normal(ks[17], (C,), jnp.float32)),  # bn3 running_var
    )

    x = jax.random.normal(ks[18], (B, L, nvars, c_out), jnp.float32)

    out = shuffle_conv_forward(x, params, nvars, c_out)
    out = jax.block_until_ready(out)

    ref = reference_forward(x, params, nvars, c_out)
    assert out.shape == (B, L, nvars, c_out)
    assert jnp.allclose(out, ref, atol=1e-4, rtol=1e-4), (
        f"max abs err = {jnp.max(jnp.abs(out - ref))}")

    print("KERNEL_OK")
</pallas_src>

<mosaic_0001>
module attributes {stable_mosaic.version = 11 : i64} {
  func.func @shuffle_conv_kernel(%arg0: i32, %arg1: memref<128x32xf32, #tpu.memory_space<vmem>>, %arg2: memref<64x32xf32, #tpu.memory_space<vmem>>, %arg3: memref<32x32xf32, #tpu.memory_space<vmem>>, %arg4: memref<32x6xf32, #tpu.memory_space<vmem>>, %arg5: memref<32x128xf32, #tpu.memory_space<vmem>>) attributes {dimension_semantics = [#tpu.dimension_semantics<parallel>], iteration_bounds = array<i64: 2>, scalar_prefetch = 0 : i64, scratch_operands = 0 : i64, tpu.core_type = #tpu.core_type<tc>, window_params = [{transform_indices = @transform_0, window_bounds = array<i64: 128, 32>}, {pipeline_mode = #tpu.pipeline_mode<synchronous>, transform_indices = @transform_1, window_bounds = array<i64: 64, 32>}, {pipeline_mode = #tpu.pipeline_mode<synchronous>, transform_indices = @transform_2, window_bounds = array<i64: 32, 32>}, {pipeline_mode = #tpu.pipeline_mode<synchronous>, transform_indices = @transform_3, window_bounds = array<i64: 32, 6>}, {transform_indices = @transform_4, window_bounds = array<i64: 32, 128>}]} {
    %c0 = arith.constant 0 : index
    %c0_0 = arith.constant 0 : index
    %0 = vector.load %arg1[%c0, %c0_0] : memref<128x32xf32, #tpu.memory_space<vmem>>, vector<128x32xf32>
    %c0_1 = arith.constant 0 : index
    %c0_2 = arith.constant 0 : index
    %1 = vector.load %arg2[%c0_1, %c0_2] : memref<64x32xf32, #tpu.memory_space<vmem>>, vector<64x32xf32>
    %c0_3 = arith.constant 0 : index
    %c0_4 = arith.constant 0 : index
    %2 = vector.load %arg3[%c0_3, %c0_4] : memref<32x32xf32, #tpu.memory_space<vmem>>, vector<32x32xf32>
    %c0_5 = arith.constant 0 : index
    %c0_6 = arith.constant 0 : index
    %3 = vector.load %arg4[%c0_5, %c0_6] : memref<32x6xf32, #tpu.memory_space<vmem>>, vector<32x6xf32>
    %4 = vector.extract_strided_slice %3 {offsets = [0, 0], sizes = [32, 1], strides = [1, 1]} : vector<32x6xf32> to vector<32x1xf32>
    %5 = vector.extract_strided_slice %3 {offsets = [0, 1], sizes = [32, 1], strides = [1, 1]} : vector<32x6xf32> to vector<32x1xf32>
    %6 = vector.extract_strided_slice %3 {offsets = [0, 2], sizes = [32, 1], strides = [1, 1]} : vector<32x6xf32> to vector<32x1xf32>
    %7 = vector.extract_strided_slice %3 {offsets = [0, 3], sizes = [32, 1], strides = [1, 1]} : vector<32x6xf32> to vector<32x1xf32>
    %8 = vector.extract_strided_slice %3 {offsets = [0, 4], sizes = [32, 1], strides = [1, 1]} : vector<32x6xf32> to vector<32x1xf32>
    %9 = vector.extract_strided_slice %3 {offsets = [0, 5], sizes = [32, 1], strides = [1, 1]} : vector<32x6xf32> to vector<32x1xf32>
    %cst = arith.constant dense<0.000000e+00> : vector<64x128xf32>
    %10 = tpu.matmul %1, %0, %cst {dimension_numbers = #tpu.dot_dimension_numbers<[1], [1], [0], [0], [0, 0, 1, 0], [], []>} : vector<64x32xf32>, vector<128x32xf32>, vector<64x128xf32> -> vector<64x128xf32>
    %11 = vector.extract_strided_slice %10 {offsets = [0, 0], sizes = [32, 128], strides = [1, 1]} : vector<64x128xf32> to vector<32x128xf32>
    %12 = vector.extract_strided_slice %10 {offsets = [32, 0], sizes = [32, 128], strides = [1, 1]} : vector<64x128xf32> to vector<32x128xf32>
    %13 = vector.broadcast %4 : vector<32x1xf32> to vector<32x128xf32>
    %14 = arith.addf %11, %13 : vector<32x128xf32>
    %cst_7 = arith.constant 0.000000e+00 : f32
    %15 = vector.broadcast %cst_7 : f32 to vector<32x128xf32>
    %16 = arith.maximumf %14, %15 : vector<32x128xf32>
    %17 = tpu.iota {dimensions = array<i32: 1>} : vector<32x128xi32>
    %c16_i32 = arith.constant 16 : i32
    %c0_i32 = arith.constant 0 : i32
    %18 = arith.cmpi eq, %c16_i32, %c0_i32 : i32
    %c1_i32 = arith.constant 1 : i32
    %19 = arith.select %18, %c1_i32, %c16_i32 : i32
    %20 = vector.broadcast %19 : i32 to vector<32x128xi32>
    %21 = arith.remsi %17, %20 : vector<32x128xi32>
    %c0_i32_8 = arith.constant 0 : i32
    %22 = vector.broadcast %c0_i32_8 : i32 to vector<32x128xi32>
    %23 = arith.cmpi ne, %21, %22 : vector<32x128xi32>
    %c0_i32_9 = arith.constant 0 : i32
    %24 = vector.broadcast %c0_i32_9 : i32 to vector<32x128xi32>
    %25 = arith.cmpi slt, %21, %24 : vector<32x128xi32>
    %c0_i32_10 = arith.constant 0 : i32
    %26 = arith.cmpi slt, %19, %c0_i32_10 : i32
    %27 = vector.broadcast %26 : i1 to vector<32x128xi1>
    %28 = vector.broadcast %27 : vector<32x128xi1> to vector<32x128xi1>
    %29 = arith.xori %25, %28 : vector<32x128xi1>
    %30 = arith.andi %29, %23 : vector<32x128xi1>
    %31 = vector.broadcast %19 : i32 to vector<32x128xi32>
    %32 = arith.addi %21, %31 : vector<32x128xi32>
    %33 = arith.select %30, %32, %21 : vector<32x128xi1>, vector<32x128xi32>
    %c0_i32_11 = arith.constant 0 : i32
    %34 = vector.broadcast %c0_i32_11 : i32 to vector<32x128xi32>
    %35 = arith.cmpi ne, %33, %34 : vector<32x128xi32>
    %c1_i32_12 = arith.constant 1 : i32
    %36 = tpu.dynamic_rotate %16 by %c1_i32_12 dim 1 : vector<32x128xf32>, i32 -> vector<32x128xf32>
    %cst_13 = arith.constant 0.000000e+00 : f32
    %37 = vector.broadcast %cst_13 : f32 to vector<32x128xf32>
    %38 = arith.select %35, %36, %37 : vector<32x128xi1>, vector<32x128xf32>
    %c15_i32 = arith.constant 15 : i32
    %39 = vector.broadcast %c15_i32 : i32 to vector<32x128xi32>
    %40 = arith.cmpi ne, %33, %39 : vector<32x128xi32>
    %c127_i32 = arith.constant 127 : i32
    %41 = tpu.dynamic_rotate %16 by %c127_i32 dim 1 : vector<32x128xf32>, i32 -> vector<32x128xf32>
    %cst_14 = arith.constant 0.000000e+00 : f32
    %42 = vector.broadcast %cst_14 : f32 to vector<32x128xf32>
    %43 = arith.select %40, %41, %42 : vector<32x128xi1>, vector<32x128xf32>
    %44 = vector.broadcast %5 : vector<32x1xf32> to vector<32x128xf32>
    %45 = arith.mulf %44, %38 : vector<32x128xf32>
    %46 = vector.broadcast %6 : vector<32x1xf32> to vector<32x128xf32>
    %47 = arith.mulf %46, %16 : vector<32x128xf32>
    %48 = arith.addf %45, %47 : vector<32x128xf32>
    %49 = vector.broadcast %7 : vector<32x1xf32> to vector<32x128xf32>
    %50 = arith.mulf %49, %43 : vector<32x128xf32>
    %51 = arith.addf %48, %50 : vector<32x128xf32>
    %52 = vector.broadcast %8 : vector<32x1xf32> to vector<32x128xf32>
    %53 = arith.addf %51, %52 : vector<32x128xf32>
    %cst_15 = arith.constant dense<0.000000e+00> : vector<32x128xf32>
    %54 = tpu.matmul %2, %53, %cst_15 {dimension_numbers = #tpu.dot_dimension_numbers<[1], [0], [0], [1], [0, 0, 1, 1], [], []>} : vector<32x32xf32>, vector<32x128xf32>, vector<32x128xf32> -> vector<32x128xf32>
    %55 = vector.broadcast %9 : vector<32x1xf32> to vector<32x128xf32>
    %56 = arith.addf %54, %55 : vector<32x128xf32>
    %cst_16 = arith.constant 0.707106769 : f32
    %57 = vector.broadcast %cst_16 : f32 to vector<32x128xf32>
    %58 = arith.mulf %56, %57 : vector<32x128xf32>
    %59 = math.absf %58 : vector<32x128xf32>
    %cst_17 = arith.constant 0.327591091 : f32
    %60 = vector.broadcast %cst_17 : f32 to vector<32x128xf32>
    %61 = arith.mulf %60, %59 : vector<32x128xf32>
    %cst_18 = arith.constant 1.000000e+00 : f32
    %62 = vector.broadcast %cst_18 : f32 to vector<32x128xf32>
    %63 = arith.addf %62, %61 : vector<32x128xf32>
    %cst_19 = arith.constant 1.000000e+00 : f32
    %64 = vector.broadcast %cst_19 : f32 to vector<32x128xf32>
    %65 = arith.divf %64, %63 : vector<32x128xf32>
    %cst_20 = arith.constant 1.06140542 : f32
    %66 = vector.broadcast %cst_20 : f32 to vector<32x128xf32>
    %67 = arith.mulf %66, %65 : vector<32x128xf32>
    %cst_21 = arith.constant 1.45315206 : f32
    %68 = vector.broadcast %cst_21 : f32 to vector<32x128xf32>
    %69 = arith.subf %67, %68 : vector<32x128xf32>
    %70 = arith.mulf %69, %65 : vector<32x128xf32>
    %cst_22 = arith.constant 1.42141378 : f32
    %71 = vector.broadcast %cst_22 : f32 to vector<32x128xf32>
    %72 = arith.addf %70, %71 : vector<32x128xf32>
    %73 = arith.mulf %72, %65 : vector<32x128xf32>
    %cst_23 = arith.constant 0.284496725 : f32
    %74 = vector.broadcast %cst_23 : f32 to vector<32x128xf32>
    %75 = arith.subf %73, %74 : vector<32x128xf32>
    %76 = arith.mulf %75, %65 : vector<32x128xf32>
    %cst_24 = arith.constant 0.254829586 : f32
    %77 = vector.broadcast %cst_24 : f32 to vector<32x128xf32>
    %78 = arith.addf %76, %77 : vector<32x128xf32>
    %79 = arith.mulf %78, %65 : vector<32x128xf32>
    %cst_25 = arith.constant 0.000000e+00 : f32
    %80 = vector.broadcast %cst_25 : f32 to vector<32x128xf32>
    %81 = arith.subf %80, %59 : vector<32x128xf32>
    %82 = arith.mulf %81, %59 : vector<32x128xf32>
    %83 = math.exp %82 : vector<32x128xf32>
    %84 = arith.mulf %79, %83 : vector<32x128xf32>
    %cst_26 = arith.constant 1.000000e+00 : f32
    %85 = vector.broadcast %cst_26 : f32 to vector<32x128xf32>
    %86 = arith.subf %85, %84 : vector<32x128xf32>
    %cst_27 = arith.constant 0.000000e+00 : f32
    %87 = vector.broadcast %cst_27 : f32 to vector<32x128xf32>
    %88 = arith.cmpf oge, %58, %87 : vector<32x128xf32>
    %cst_28 = arith.constant 0.000000e+00 : f32
    %89 = vector.broadcast %cst_28 : f32 to vector<32x128xf32>
    %90 = arith.subf %89, %86 : vector<32x128xf32>
    %91 = arith.select %88, %86, %90 : vector<32x128xi1>, vector<32x128xf32>
    %cst_29 = arith.constant 5.000000e-01 : f32
    %92 = vector.broadcast %cst_29 : f32 to vector<32x128xf32>
    %93 = arith.mulf %92, %56 : vector<32x128xf32>
    %cst_30 = arith.constant 1.000000e+00 : f32
    %94 = vector.broadcast %cst_30 : f32 to vector<32x128xf32>
    %95 = arith.addf %94, %91 : vector<32x128xf32>
    %96 = arith.mulf %93, %95 : vector<32x128xf32>
    %97 = arith.addf %96, %12 : vector<32x128xf32>
    %c0_31 = arith.constant 0 : index
    %c0_32 = arith.constant 0 : index
    %98 = vector.load %arg5[%c0_31, %c0_32] : memref<32x128xf32, #tpu.memory_space<vmem>>, vector<32x128xf32>
    tpu.vector_store %arg5[%c0_31, %c0_32], %97 {strides = array<i32>} : memref<32x128xf32, #tpu.memory_space<vmem>>, vector<32x128xf32>,
    return
  }
  func.func @transform_0(%arg0: i32) -> (i32, i32) {
    %c0_i32 = arith.constant 0 : i32
    %c0_i32_0 = arith.constant 0 : i32
    return %arg0, %c0_i32 : i32, i32
  }
  func.func @transform_1(%arg0: i32) -> (i32, i32) {
    %c0_i32 = arith.constant 0 : i32
    %c0_i32_0 = arith.constant 0 : i32
    %c0_i32_1 = arith.constant 0 : i32
    return %c0_i32, %c0_i32_0 : i32, i32
  }
  func.func @transform_2(%arg0: i32) -> (i32, i32) {
    %c0_i32 = arith.constant 0 : i32
    %c0_i32_0 = arith.constant 0 : i32
    %c0_i32_1 = arith.constant 0 : i32
    return %c0_i32, %c0_i32_0 : i32, i32
  }
  func.func @transform_3(%arg0: i32) -> (i32, i32) {
    %c0_i32 = arith.constant 0 : i32
    %c0_i32_0 = arith.constant 0 : i32
    %c0_i32_1 = arith.constant 0 : i32
    return %c0_i32, %c0_i32_0 : i32, i32
  }
  func.func @transform_4(%arg0: i32) -> (i32, i32) {
    %c0_i32 = arith.constant 0 : i32
    %c0_i32_0 = arith.constant 0 : i32
    return %c0_i32, %arg0 : i32, i32
  }
}

</mosaic_0001>

<llo_original>
// kernel: tpu_custom_call.1
$region0: #{tpu_custom_call.1}
  #allocation0 [shape = 'u32[]', space=smem, size = 0x4, offset = 0x4, fixed_abs, tag = 'smem constant byte address 0x4 - core index']
  #allocation1 [shape = 'u32[72,128]{1,0:T(1,128)}', space=vmem, size = 0x9000, scoped, tag = 'internal scratch']
  %s0 = inlined_call_operand.vmem [shape: f32[256,32], index: 0, kind: input, shape index: {}]
  %s1 = inlined_call_operand.vmem [shape: f32[64,32], index: 1, kind: input, shape index: {}]
  %s2 = inlined_call_operand.vmem [shape: f32[32,32], index: 2, kind: input, shape index: {}]
  %s3 = inlined_call_operand.vmem [shape: f32[32,6], index: 3, kind: input, shape index: {}]
  %s4 = inlined_call_operand.hbm [shape: f32[32,256], index: 4, kind: output, shape index: {}]
  %s5 = sld [smem:[#allocation0]]
  $region49: #{tpu_custom_call.1} parent=0
    _
  %s7 = ssub.s32 1, %s5
  %s8 = scalar_select 0, %s7, %s5
  $region1: #{tpu_custom_call.1} parent=0
    #allocation2 [shape = 'u8[32768]{0}', space=vmem, size = 0x8000, scoped, tag = 'output window, operand 0']
    #allocation3 [shape = 's32[2]{0}', space=sflag, size = 0x8, scoped, tag = 'scoped memory for tpu_custom_call.1']
    %9 = vsyncpa [#allocation3], 0
    %s10 = scalar_lea.sflag [#allocation3], 1
    %11 = vsyncpa %s10, 0
    loop: start=0, step=1, limit=4
    $region2: #{tpu_custom_call.1} parent=1 // loop_pre_header
      _
    $region3: #{tpu_custom_call.1} parent=1 // loop_header
      %s13 = sphi 0, %s17
      %p14 = scmp.ge.s32.totalorder %s13, 4
      %s23 = sphi 0, %s25
      %s26 = sphi 0, %s23
      %s27 = sphi 0, %s26
      %s43 = sphi 0, %s27
      %s47 = sphi 0, %s47
      %s49 = sphi 0, %s47
      %s50 = sphi 0, %s49
      %s64 = sphi 0, %s50
      %s68 = sphi 0, %s68
      %s70 = sphi 0, %s68
      %s71 = sphi 0, %s70
      %s85 = sphi 0, %s71
      %s89 = sphi 0, %s89
      %s91 = sphi 0, %s89
      %s92 = sphi 0, %s91
      %s106 = sphi 0, %s92
      %s112 = sphi 0, %s114
      %s115 = sphi 0, %s112
      %s116 = sphi 0, %s115
      %s132 = sphi 0, %s116
    $region4: #{tpu_custom_call.1} parent=1 // loop_header_branch
      %16 = sbr.rel (%p14) target = $region8
    $region5: #{tpu_custom_call.1} parent=1 // loop_body
      %s18 = ssub.s32 %s13, 1
      %s19 = ssub.s32 %s13, 2
      %s20 = sadd.s32 %s13, 1
      %s21 = ssub.s32 %s13, %s20
      %p22 = scmp.eq.s32.totalorder %s21, 0
      %s24 = sadd.s32 %s23, 1
      %s25 = scalar_select %p22, %s23, %s24
      %p28 = pneg %p22
      %p29 = scmp.eq.s32.totalorder %s13, 1
      %p30 = por %p28, %p29
      %p31 = scmp.ne.s32.totalorder %s23, %s26
      %p32 = scmp.eq.s32.totalorder %s13, 0
      %p33 = por %p31, %p32
      %p34 = scmp.ne.s32.totalorder %s23, %s26
      %p35 = scmp.eq.s32.totalorder %s18, 1
      %p36 = por %p34, %p35
      %p37 = scmp.ne.s32.totalorder %s26, %s27
      %p38 = scmp.eq.s32.totalorder %s18, 0
      %p39 = por %p37, %p38
      %p40 = scmp.ne.s32.totalorder %s26, %s27
      %p41 = scmp.eq.s32.totalorder %s19, 1
      %p42 = por %p40, %p41
      %p44 = scmp.ne.s32.totalorder %s27, %s43
      %p45 = scmp.eq.s32.totalorder %s19, 0
      %p46 = por %p44, %p45
      %s48 = sadd.s32 %s47, 1
      %p51 = scmp.eq.s32.totalorder %s13, 1
      %p52 = scmp.ne.s32.totalorder %s47, %s49
      %p53 = scmp.eq.s32.totalorder %s13, 0
      %p54 = por %p52, %p53
      %p55 = scmp.ne.s32.totalorder %s47, %s49
      %p56 = scmp.eq.s32.totalorder %s18, 1
      %p57 = por %p55, %p56
      %p58 = scmp.ne.s32.totalorder %s49, %s50
      %p59 = scmp.eq.s32.totalorder %s18, 0
      %p60 = por %p58, %p59
      %p61 = scmp.ne.s32.totalorder %s49, %s50
      %p62 = scmp.eq.s32.totalorder %s19, 1
      %p63 = por %p61, %p62
      %p65 = scmp.ne.s32.totalorder %s50, %s64
      %p66 = scmp.eq.s32.totalorder %s19, 0
      %p67 = por %p65, %p66
      %s69 = sadd.s32 %s68, 1
      %p72 = scmp.eq.s32.totalorder %s13, 1
      %p73 = scmp.ne.s32.totalorder %s68, %s70
      %p74 = scmp.eq.s32.totalorder %s13, 0
      %p75 = por %p73, %p74
      %p76 = scmp.ne.s32.totalorder %s68, %s70
      %p77 = scmp.eq.s32.totalorder %s18, 1
      %p78 = por %p76, %p77
      %p79 = scmp.ne.s32.totalorder %s70, %s71
      %p80 = scmp.eq.s32.totalorder %s18, 0
      %p81 = por %p79, %p80
      %p82 = scmp.ne.s32.totalorder %s70, %s71
      %p83 = scmp.eq.s32.totalorder %s19, 1
      %p84 = por %p82, %p83
      %p86 = scmp.ne.s32.totalorder %s71, %s85
      %p87 = scmp.eq.s32.totalorder %s19, 0
      %p88 = por %p86, %p87
      %s90 = sadd.s32 %s89, 1
      %p93 = scmp.eq.s32.totalorder %s13, 1
      %p94 = scmp.ne.s32.totalorder %s89, %s91
      %p95 = scmp.eq.s32.totalorder %s13, 0
      %p96 = por %p94, %p95
      %p97 = scmp.ne.s32.totalorder %s89, %s91
      %p98 = scmp.eq.s32.totalorder %s18, 1
      %p99 = por %p97, %p98
      %p100 = scmp.ne.s32.totalorder %s91, %s92
      %p101 = scmp.eq.s32.totalorder %s18, 0
      %p102 = por %p100, %p101
      %p103 = scmp.ne.s32.totalorder %s91, %s92
      %p104 = scmp.eq.s32.totalorder %s19, 1
      %p105 = por %p103, %p104
      %p107 = scmp.ne.s32.totalorder %s92, %s106
      %p108 = scmp.eq.s32.totalorder %s19, 0
      %p109 = por %p107, %p108
      %s110 = ssub.s32 %s13, %s20
      %p111 = scmp.eq.s32.totalorder %s110, 0
      %s113 = sadd.s32 %s112, 1
      %s114 = scalar_select %p111, %s112, %s113
      %p117 = pneg %p111
      %p118 = scmp.eq.s32.totalorder %s13, 1
      %p119 = por %p117, %p118
      %p120 = scmp.ne.s32.totalorder %s112, %s115
      %p121 = scmp.eq.s32.totalorder %s13, 0
      %p122 = por %p120, %p121
      %p123 = scmp.ne.s32.totalorder %s112, %s115
      %p124 = scmp.eq.s32.totalorder %s18, 1
      %p125 = por %p123, %p124
      %p126 = scmp.ne.s32.totalorder %s115, %s116
      %p127 = scmp.eq.s32.totalorder %s18, 0
      %p128 = por %p126, %p127
      %p129 = scmp.ne.s32.totalorder %s115, %s116
      %p130 = scmp.eq.s32.totalorder %s19, 1
      %p131 = por %p129, %p130
      %p133 = scmp.ne.s32.totalorder %s116, %s132
      %p134 = scmp.eq.s32.totalorder %s19, 0
      %p135 = por %p133, %p134
      %p136 = scmp.le.s32.totalorder 1, %s13
      %p137 = scmp.lt.s32.totalorder %s13, 3
      %p138 = pnand %p136, %p137
      %p139 = pneg %p138
      // Predicated region
      $region9: #{tpu_custom_call.1} parent=5 // pred_check
        _
      $region10: #{tpu_custom_call.1} parent=5 // pred_check_branch
        %141 = sbr.rel (%p138) target = $region12
      $region11: #{tpu_custom_call.1} parent=5 // pred_region
        %s142 = ssub.s32 %s13, 1
        // Predicated region
        $region13: #{tpu_custom_call.1} parent=11 // pred_check
          %p143 = pneg %p60
        $region14: #{tpu_custom_call.1} parent=11 // pred_check_branch
          %145 = sbr.rel (%p143) target = $region16
        $region15: #{tpu_custom_call.1} parent=11 // pred_region
          _
        $region16: #{tpu_custom_call.1} parent=11 // pred_fallthru
          _
        // Predicated region
        $region17: #{tpu_custom_call.1} parent=11 // pred_check
          %p146 = pneg %p81
        $region18: #{tpu_custom_call.1} parent=11 // pred_check_branch
          %148 = sbr.rel (%p146) target = $region20
        $region19: #{tpu_custom_call.1} parent=11 // pred_region
          _
        $region20: #{tpu_custom_call.1} parent=11 // pred_fallthru
          _
        // Predicated region
        $region21: #{tpu_custom_call.1} parent=11 // pred_check
          %p149 = pneg %p102
        $region22: #{tpu_custom_call.1} parent=11 // pred_check_branch
          %151 = sbr.rel (%p149) target = $region24
        $region23: #{tpu_custom_call.1} parent=11 // pred_region
          _
        $region24: #{tpu_custom_call.1} parent=11 // pred_fallthru
          _
      $region12: #{tpu_custom_call.1} parent=5 // pred_fallthru
        _
      %p152 = scmp.lt.s32.totalorder %s13, 2
      // Predicated region
      $region25: #{tpu_custom_call.1} parent=5 // pred_check
        %p153 = pneg %p152
      $region26: #{tpu_custom_call.1} parent=5 // pred_check_branch
        %155 = sbr.rel (%p153) target = $region28
      $region27: #{tpu_custom_call.1} parent=5 // pred_region
        // Predicated region
        $region29: #{tpu_custom_call.1} parent=27 // pred_check
          %p156 = pneg %p33
        $region30: #{tpu_custom_call.1} parent=27 // pred_check_branch
          %158 = sbr.rel (%p156) target = $region32
        $region31: #{tpu_custom_call.1} parent=27 // pred_region
          %s159 = smul.u32 16, %s13
          %p160 = scmp.lt.s32.totalorder %s159, 31
          %s161 = scalar_select %p160, %s159, 31
          %s162 = smul.addr %s161, 8
          %s163 = scalar_lea.vmem %s0, %s162
          %s164 = smul.u32 16, %s13
        $region32: #{tpu_custom_call.1} parent=27 // pred_fallthru
          _
      $region28: #{tpu_custom_call.1} parent=5 // pred_fallthru
        _
      %p165 = scmp.le.s32.totalorder 1, %s13
      %p166 = scmp.lt.s32.totalorder %s13, 3
      %p167 = pnand %p165, %p166
      %p168 = pneg %p167
      // Predicated region
      $region33: #{tpu_custom_call.1} parent=5 // pred_check
        _
      $region34: #{tpu_custom_call.1} parent=5 // pred_check_branch
        %170 = sbr.rel (%p167) target = $region36
      $region35: #{tpu_custom_call.1} parent=5 // pred_region
        %s171 = ssub.s32 %s13, 1
        %s172 = smul.u32 16, %s18
        %p173 = scmp.lt.s32.totalorder %s172, 31
        %s174 = scalar_select %p173, %s172, 31
        %s175 = smul.addr %s174, 8
        %s176 = scalar_lea.vmem %s0, %s175
        %p177 = pneg %p39
        %p178 = pneg %p36
        %p179 = pneg %p60
        %p180 = pneg %p57
        %p181 = pneg %p81
        %p182 = pneg %p78
        %p183 = pneg %p102
        %p184 = pneg %p99
        %p185 = pneg %p128
        %p186 = pneg %p125
        %s187 = sand.u32 %s115, 1
        %s188 = scalar_lea.sflag [#allocation3], %s187
        %s189 = sand.u32 %s115, 1
        %s190 = smul.addr %s189, 32
        %s191 = scalar_lea.vmem [#allocation2], %s190
        %s192 = smul.u32 16, %s18
        %p193 = scmp.lt.s32.totalorder %s192, 31
        %s194 = scalar_select %p193, %s192, 31
        %s195 = smul.addr %s194, 8
        %s196 = scalar_lea.vmem %s0, %s195
        %s197 = smul.u32 16, %s18
        %v198 = vld [vmem:[%s196] sm:$0xff]
        %v199 = vld [vmem:[%s196 + $0x8] sm:$0xff]
        %v200 = vld [vmem:[%s196 + $0x10] sm:$0xff]
        %v201 = vld [vmem:[%s196 + $0x18] sm:$0xff]
        %v202 = vld [vmem:[%s196 + $0x20] sm:$0xff]
        %v203 = vld [vmem:[%s196 + $0x28] sm:$0xff]
        %v204 = vld [vmem:[%s196 + $0x30] sm:$0xff]
        %v205 = vld [vmem:[%s196 + $0x38] sm:$0xff]
        %v206 = vld [vmem:[%s196 + $0x40] sm:$0xff]
        %v207 = vld [vmem:[%s196 + $0x48] sm:$0xff]
        %v208 = vld [vmem:[%s196 + $0x50] sm:$0xff]
        %v209 = vld [vmem:[%s196 + $0x58] sm:$0xff]
        %v210 = vld [vmem:[%s196 + $0x60] sm:$0xff]
        %v211 = vld [vmem:[%s196 + $0x68] sm:$0xff]
        %v212 = vld [vmem:[%s196 + $0x70] sm:$0xff]
        %v213 = vld [vmem:[%s196 + $0x78] sm:$0xff]
        %v214 = vld [vmem:[%s1] sm:$0xff]
        %v215 = vld [vmem:[%s1 + $0x8] sm:$0xff]
        %v216 = vld [vmem:[%s1 + $0x10] sm:$0xff]
        %v217 = vld [vmem:[%s1 + $0x18] sm:$0xff]
        %v218 = vld [vmem:[%s1 + $0x20] sm:$0xff]
        %v219 = vld [vmem:[%s1 + $0x28] sm:$0xff]
        %v220 = vld [vmem:[%s1 + $0x30] sm:$0xff]
        %v221 = vld [vmem:[%s1 + $0x38] sm:$0xff]
        %v222 = vld [vmem:[%s2] sm:$0xff]
        %v223 = vld [vmem:[%s2 + $0x8] sm:$0xff]
        %v224 = vld [vmem:[%s2 + $0x10] sm:$0xff]
        %v225 = vld [vmem:[%s2 + $0x18] sm:$0xff]
        %v226 = vld [vmem:[%s3] sm:$0xff]
        %v227 = vld [vmem:[%s3 + $0x8] sm:$0xff]
        %v228 = vld [vmem:[%s3 + $0x10] sm:$0xff]
        %v229 = vld [vmem:[%s3 + $0x18] sm:$0xff]
        %vm230 = vcmask 261120
        %v232 = vsel %vm230, %v214, 0
        %v235 = vsel %vm230, %v215, 0
        %v238 = vsel %vm230, %v216, 0
        %v241 = vsel %vm230, %v217, 0
        %v244 = vsel %vm230, %v218, 0
        %v247 = vsel %vm230, %v219, 0
        %v250 = vsel %vm230, %v220, 0
        %v253 = vsel %vm230, %v221, 0
        %v256 = vsel %vm230, %v198, 0
        %v259 = vsel %vm230, %v199, 0
        %v262 = vsel %vm230, %v200, 0
        %v265 = vsel %vm230, %v201, 0
        %v268 = vsel %vm230, %v202, 0
        %v271 = vsel %vm230, %v203, 0
        %v274 = vsel %vm230, %v204, 0
        %v277 = vsel %vm230, %v205, 0
        %v280 = vsel %vm230, %v206, 0
        %v283 = vsel %vm230, %v207, 0
        %v286 = vsel %vm230, %v208, 0
        %v289 = vsel %vm230, %v209, 0
        %v292 = vsel %vm230, %v210, 0
        %v295 = vsel %vm230, %v211, 0
        %v298 = vsel %vm230, %v212, 0
        %v301 = vsel %vm230, %v213, 0
        %303 = vmatpush.xpose.msra.mxu0 %v301
        %304 = vmatpush.xpose.msra.mxu0 %v298
        %305 = vmatpush.xpose.msra.mxu0 %v295
        %306 = vmatpush.xpose.msra.mxu0 %v292
        %307 = vmatpush.xpose.msra.mxu0 %v289
        %308 = vmatpush.xpose.msra.mxu0 %v286
        %309 = vmatpush.xpose.msra.mxu0 %v283
        %310 = vmatpush.xpose.msra.mxu0 %v280
        %311 = vmatpush.xpose.msra.mxu0 %v277
        %312 = vmatpush.xpose.msra.mxu0 %v274
        %313 = vmatpush.xpose.msra.mxu0 %v271
        %314 = vmatpush.xpose.msra.mxu0 %v268
        %315 = vmatpush.xpose.msra.mxu0 %v265
        %316 = vmatpush.xpose.msra.mxu0 %v262
        %317 = vmatpush.xpose.msra.mxu0 %v259
        %318 = vmatpush.xpose.msra.mxu0 %v256
        %319 = vmatmul.f32.gmra.mxu0 %v232
        %v320 = vpop.f32.mrf.mxu0
        %v321 = vadd.f32 0.0, %v320
        %322 = vmatmul.f32.gmra.mxu0 %v235
        %v323 = vpop.f32.mrf.mxu0
        %v324 = vadd.f32 0.0, %v323
        %325 = vmatmul.f32.gmra.mxu0 %v238
        %v326 = vpop.f32.mrf.mxu0
        %v327 = vadd.f32 0.0, %v326
        %328 = vmatmul.f32.gmra.mxu0 %v241
        %v329 = vpop.f32.mrf.mxu0
        %v330 = vadd.f32 0.0, %v329
        %331 = vmatmul.f32.gmra.mxu0 %v244
        %v332 = vpop.f32.mrf.mxu0
        %v333 = vadd.f32 0.0, %v332
        %334 = vmatmul.f32.gmra.mxu0 %v247
        %v335 = vpop.f32.mrf.mxu0
        %v336 = vadd.f32 0.0, %v335
        %337 = vmatmul.f32.gmra.mxu0 %v250
        %v338 = vpop.f32.mrf.mxu0
        %v339 = vadd.f32 0.0, %v338
        %340 = vmatmul.f32.gmra.mxu0 %v253
        %v341 = vpop.f32.mrf.mxu0
        %v342 = vadd.f32 0.0, %v341
        %343 = vdwg.mxu0
        %345 = vset.pattern.permute.xlu0 0
        %346 = vperm.xlu0 %345, %v226
        %v347 = vpop.permute.xlu0 %346
        %350 = vset.pattern.permute.xlu0 0
        %351 = vperm.xlu0 %350, %v227
        %v352 = vpop.permute.xlu0 %351
        %355 = vset.pattern.permute.xlu0 0
        %356 = vperm.xlu0 %355, %v228
        %v357 = vpop.permute.xlu0 %356
        %360 = vset.pattern.permute.xlu0 0
        %361 = vperm.xlu0 %360, %v229
        %v362 = vpop.permute.xlu0 %361
        %v364 = vadd.f32 %v321, %v347
        %v365 = vadd.f32 %v324, %v352
        %v366 = vadd.f32 %v327, %v357
        %v367 = vadd.f32 %v330, %v362
        %v368 = vmax.f32 %v364, 0.0
        %v369 = vmax.f32 %v365, 0.0
        %v370 = vmax.f32 %v366, 0.0
        %v371 = vmax.f32 %v367, 0.0
        %v372 = vlaneseq
        %v373 = vand.u32 %v372, 127
        %vm374 = vcmp.lt.s32.totalorder %v373, 0
        %v375 = vsub.s32 0, %v373
        %v376 = vsel %vm374, %v375, %v373
        %v377 = vshrl.u32 %v376, 4
        %v378 = vand.u32 %v376, 15
        %v379 = vsub.s32 0, %v378
        %v380 = vsel %vm374, %v379, %v378
        %vm381 = vcmp.ne.s32.totalorder %v380, 0
        %vm382 = vcmp.lt.s32.totalorder %v380, 0
        %vm383 = vmand %vm382, %vm381
        %v384 = vadd.s32 %v380, 16
        %v385 = vsel %vm383, %v384, %v380
        %vm386 = vcmp.ne.s32.totalorder %v385, 0
        %387 = vrot.lane.b32.xlu0 %v368, 1
        %v388 = vpop.permute.xlu0 %387
        %389 = vrot.lane.b32.xlu0 %v369, 1
        %v390 = vpop.permute.xlu0 %389
        %391 = vrot.lane.b32.xlu0 %v370, 1
        %v392 = vpop.permute.xlu0 %391
        %393 = vrot.lane.b32.xlu0 %v371, 1
        %v394 = vpop.permute.xlu0 %393
        %v395 = vsel %vm386, %v388, 0.0
        %v396 = vsel %vm386, %v390, 0.0
        %v397 = vsel %vm386, %v392, 0.0
        %v398 = vsel %vm386, %v394, 0.0
        %vm399 = vcmp.ne.s32.totalorder %v385, 15
        %400 = vrot.lane.b32.xlu0 %v368, 127
        %v401 = vpop.permute.xlu0 %400
        %402 = vrot.lane.b32.xlu0 %v369, 127
        %v403 = vpop.permute.xlu0 %402
        %404 = vrot.lane.b32.xlu0 %v370, 127
        %v405 = vpop.permute.xlu0 %404
        %406 = vrot.lane.b32.xlu0 %v371, 127
        %v407 = vpop.permute.xlu0 %406
        %v408 = vsel %vm399, %v401, 0.0
        %v409 = vsel %vm399, %v403, 0.0
        %v410 = vsel %vm399, %v405, 0.0
        %v411 = vsel %vm399, %v407, 0.0
        %412 = vset.pattern.permute.xlu0 1
        %413 = vperm.xlu0 %412, %v226
        %v414 = vpop.permute.xlu0 %413
        %416 = vset.pattern.permute.xlu0 1
        %417 = vperm.xlu0 %416, %v227
        %v418 = vpop.permute.xlu0 %417
        %420 = vset.pattern.permute.xlu0 1
        %421 = vperm.xlu0 %420, %v228
        %v422 = vpop.permute.xlu0 %421
        %424 = vset.pattern.permute.xlu0 1
        %425 = vperm.xlu0 %424, %v229
        %v426 = vpop.permute.xlu0 %425
        %v428 = vmul.f32 %v414, %v395
        %v429 = vmul.f32 %v418, %v396
        %v430 = vmul.f32 %v422, %v397
        %v431 = vmul.f32 %v426, %v398
        %432 = vset.pattern.permute.xlu0 2
        %433 = vperm.xlu0 %432, %v226
        %v434 = vpop.permute.xlu0 %433
        %436 = vset.pattern.permute.xlu0 2
        %437 = vperm.xlu0 %436, %v227
        %v438 = vpop.permute.xlu0 %437
        %440 = vset.pattern.permute.xlu0 2
        %441 = vperm.xlu0 %440, %v228
        %v442 = vpop.permute.xlu0 %441
        %444 = vset.pattern.permute.xlu0 2
        %445 = vperm.xlu0 %444, %v229
        %v446 = vpop.permute.xlu0 %445
        %v448 = vmul.f32 %v434, %v368
        %v449 = vmul.f32 %v438, %v369
        %v450 = vmul.f32 %v442, %v370
        %v451 = vmul.f32 %v446, %v371
        %v452 = vadd.f32 %v428, %v448
        %v453 = vadd.f32 %v429, %v449
        %v454 = vadd.f32 %v430, %v450
        %v455 = vadd.f32 %v431, %v451
        %456 = vset.pattern.permute.xlu0 3
        %457 = vperm.xlu0 %456, %v226
        %v458 = vpop.permute.xlu0 %457
        %460 = vset.pattern.permute.xlu0 3
        %461 = vperm.xlu0 %460, %v227
        %v462 = vpop.permute.xlu0 %461
        %464 = vset.pattern.permute.xlu0 3
        %465 = vperm.xlu0 %464, %v228
        %v466 = vpop.permute.xlu0 %465
        %468 = vset.pattern.permute.xlu0 3
        %469 = vperm.xlu0 %468, %v229
        %v470 = vpop.permute.xlu0 %469
        %v472 = vmul.f32 %v458, %v408
        %v473 = vmul.f32 %v462, %v409
        %v474 = vmul.f32 %v466, %v410
        %v475 = vmul.f32 %v470, %v411
        %v476 = vadd.f32 %v452, %v472
        %v477 = vadd.f32 %v453, %v473
        %v478 = vadd.f32 %v454, %v474
        %v479 = vadd.f32 %v455, %v475
        %480 = vset.pattern.permute.xlu0 4
        %481 = vperm.xlu0 %480, %v226
        %v482 = vpop.permute.xlu0 %481
        %484 = vset.pattern.permute.xlu0 4
        %485 = vperm.xlu0 %484, %v227
        %v486 = vpop.permute.xlu0 %485
        %488 = vset.pattern.permute.xlu0 4
        %489 = vperm.xlu0 %488, %v228
        %v490 = vpop.permute.xlu0 %489
        %492 = vset.pattern.permute.xlu0 4
        %493 = vperm.xlu0 %492, %v229
        %v494 = vpop.permute.xlu0 %493
        %v496 = vadd.f32 %v476, %v482
        %v497 = vadd.f32 %v477, %v486
        %v498 = vadd.f32 %v478, %v490
        %v499 = vadd.f32 %v479, %v494
        %500 = vset.pattern.permute.xlu0 5
        %501 = vperm.xlu0 %500, %v226
        %v502 = vpop.permute.xlu0 %501
        %504 = vset.pattern.permute.xlu0 5
        %505 = vperm.xlu0 %504, %v227
        %v506 = vpop.permute.xlu0 %505
        %508 = vset.pattern.permute.xlu0 5
        %509 = vperm.xlu0 %508, %v228
        %v510 = vpop.permute.xlu0 %509
        %512 = vset.pattern.permute.xlu0 5
        %513 = vperm.xlu0 %512, %v229
        %v514 = vpop.permute.xlu0 %513
        %v517 = vsel %vm230, %v222, 0
        %v520 = vsel %vm230, %v223, 0
        %v523 = vsel %vm230, %v224, 0
        %v526 = vsel %vm230, %v225, 0
        %528 = vmatpush.msra.mxu0 0.0
        %529 = vmatpush.msra.mxu0 0.0
        %530 = vmatpush.msra.mxu0 0.0
        %531 = vmatpush.msra.mxu0 0.0
        %532 = vmatpush.msra.mxu0 0.0
        %533 = vmatpush.msra.mxu0 0.0
        %534 = vmatpush.msra.mxu0 0.0
        %535 = vmatpush.msra.mxu0 0.0
        %536 = vmatpush.msra.mxu0 0.0
        %537 = vmatpush.msra.mxu0 0.0
        %538 = vmatpush.msra.mxu0 0.0
        %539 = vmatpush.msra.mxu0 0.0
        %540 = vmatpush.msra.mxu0 %v499
        %541 = vmatpush.msra.mxu0 %v498
        %542 = vmatpush.msra.mxu0 %v497
        %543 = vmatpush.msra.mxu0 %v496
        %544 = vmatmul.f32.gmra.mxu0 %v517
        %v545 = vpop.f32.mrf.mxu0
        %v546 = vadd.f32 %v502, %v545
        %547 = vmatmul.f32.gmra.mxu0 %v520
        %v548 = vpop.f32.mrf.mxu0
        %v549 = vadd.f32 %v506, %v548
        %550 = vmatmul.f32.gmra.mxu0 %v523
        %v551 = vpop.f32.mrf.mxu0
        %v552 = vadd.f32 %v510, %v551
        %553 = vmatmul.f32.gmra.mxu0 %v526
        %v554 = vpop.f32.mrf.mxu0
        %v555 = vadd.f32 %v514, %v554
        %556 = vdwg.mxu0
        %v557 = vmul.f32 %v546, 0.70710677
        %v558 = vmul.f32 %v549, 0.70710677
        %v559 = vmul.f32 %v552, 0.70710677
        %v560 = vmul.f32 %v555, 0.70710677
        %v561 = vand.u32 2147483647, %v557
        %v562 = vand.u32 2147483647, %v558
        %v563 = vand.u32 2147483647, %v559
        %v564 = vand.u32 2147483647, %v560
        %v565 = vmul.f32 %v561, 0.3275911
        %v566 = vmul.f32 %v562, 0.3275911
        %v567 = vmul.f32 %v563, 0.3275911
        %v568 = vmul.f32 %v564, 0.3275911
        %v569 = vadd.f32 %v565, 1.0
        %v570 = vadd.f32 %v566, 1.0
        %v571 = vadd.f32 %v567, 1.0
        %v572 = vadd.f32 %v568, 1.0
        %v573 = vrcp.pop %v569
        %v574 = vmul.f32 %v569, %v573
        %v575 = vsub.f32 1.0, %v574
        %v576 = vmul.f32 %v573, %v575
        %v577 = vadd.f32 %v573, %v576
        %vm578 = vweird.f32 %v569
        %vm579 = vweird.f32 %v573
        %vm580 = vmor %vm578, %vm579
        %v581 = vsel %vm580, %v573, %v577
        %v582 = vand.u32 2147483647, %v569
        %vm583 = vcmp.eq.f32.partialorder %v582, 8.507059e+37
        %v584 = vand.u32 %v569, 2147483648
        %v585 = vor.u32 1.1754944e-38, %v584
        %v586 = vsel %vm583, %v585, %v581
        %v587 = vmul.f32 1.0, %v586
        %v588 = vrcp.pop %v570
        %v589 = vmul.f32 %v570, %v588
        %v590 = vsub.f32 1.0, %v589
        %v591 = vmul.f32 %v588, %v590
        %v592 = vadd.f32 %v588, %v591
        %vm593 = vweird.f32 %v570
        %vm594 = vweird.f32 %v588
        %vm595 = vmor %vm593, %vm594
        %v596 = vsel %vm595, %v588, %v592
        %v597 = vand.u32 2147483647, %v570
        %vm598 = vcmp.eq.f32.partialorder %v597, 8.507059e+37
        %v599 = vand.u32 %v570, 2147483648
        %v600 = vor.u32 1.1754944e-38, %v599
        %v601 = vsel %vm598, %v600, %v596
        %v602 = vmul.f32 1.0, %v601
        %v603 = vrcp.pop %v571
        %v604 = vmul.f32 %v571, %v603
        %v605 = vsub.f32 1.0, %v604
        %v606 = vmul.f32 %v603, %v605
        %v607 = vadd.f32 %v603, %v606
        %vm608 = vweird.f32 %v571
        %vm609 = vweird.f32 %v603
        %vm610 = vmor %vm608, %vm609
        %v611 = vsel %vm610, %v603, %v607
        %v612 = vand.u32 2147483647, %v571
        %vm613 = vcmp.eq.f32.partialorder %v612, 8.507059e+37
        %v614 = vand.u32 %v571, 2147483648
        %v615 = vor.u32 1.1754944e-38, %v614
        %v616 = vsel %vm613, %v615, %v611
        %v617 = vmul.f32 1.0, %v616
        %v618 = vrcp.pop %v572
        %v619 = vmul.f32 %v572, %v618
        %v620 = vsub.f32 1.0, %v619
        %v621 = vmul.f32 %v618, %v620
        %v622 = vadd.f32 %v618, %v621
        %vm623 = vweird.f32 %v572
        %vm624 = vweird.f32 %v618
        %vm625 = vmor %vm623, %vm624
        %v626 = vsel %vm625, %v618, %v622
        %v627 = vand.u32 2147483647, %v572
        %vm628 = vcmp.eq.f32.partialorder %v627, 8.507059e+37
        %v629 = vand.u32 %v572, 2147483648
        %v630 = vor.u32 1.1754944e-38, %v629
        %v631 = vsel %vm628, %v630, %v626
        %v632 = vmul.f32 1.0, %v631
        %v633 = vmul.f32 %v587, 1.0614054
        %v634 = vmul.f32 %v602, 1.0614054
        %v635 = vmul.f32 %v617, 1.0614054
        %v636 = vmul.f32 %v632, 1.0614054
        %v637 = vsub.f32 %v633, 1.4531521
        %v638 = vsub.f32 %v634, 1.4531521
        %v639 = vsub.f32 %v635, 1.4531521
        %v640 = vsub.f32 %v636, 1.4531521
        %v641 = vmul.f32 %v637, %v587
        %v642 = vmul.f32 %v638, %v602
        %v643 = vmul.f32 %v639, %v617
        %v644 = vmul.f32 %v640, %v632
        %v645 = vadd.f32 %v641, 1.4214138
        %v646 = vadd.f32 %v642, 1.4214138
        %v647 = vadd.f32 %v643, 1.4214138
        %v648 = vadd.f32 %v644, 1.4214138
        %v649 = vmul.f32 %v645, %v587
        %v650 = vmul.f32 %v646, %v602
        %v651 = vmul.f32 %v647, %v617
        %v652 = vmul.f32 %v648, %v632
        %v653 = vsub.f32 %v649, 0.28449672
        %v654 = vsub.f32 %v650, 0.28449672
        %v655 = vsub.f32 %v651, 0.28449672
        %v656 = vsub.f32 %v652, 0.28449672
        %v657 = vmul.f32 %v653, %v587
        %v658 = vmul.f32 %v654, %v602
        %v659 = vmul.f32 %v655, %v617
        %v660 = vmul.f32 %v656, %v632
        %v661 = vadd.f32 %v657, 0.2548296
        %v662 = vadd.f32 %v658, 0.2548296
        %v663 = vadd.f32 %v659, 0.2548296
        %v664 = vadd.f32 %v660, 0.2548296
        %v665 = vmul.f32 %v661, %v587
        %v666 = vmul.f32 %v662, %v602
        %v667 = vmul.f32 %v663, %v617
        %v668 = vmul.f32 %v664, %v632
        %v669 = vsub.f32 0.0, %v561
        %v670 = vsub.f32 0.0, %v562
        %v671 = vsub.f32 0.0, %v563
        %v672 = vsub.f32 0.0, %v564
        %v673 = vmul.f32 %v669, %v561
        %v674 = vmul.f32 %v670, %v562
        %v675 = vmul.f32 %v671, %v563
        %v676 = vmul.f32 %v672, %v564
        %v677 = vmul.f32 %v673, 1.442695
        %v678 = vpow.pop %v677
        %v679 = vmul.f32 %v674, 1.442695
        %v680 = vpow.pop %v679
        %v681 = vmul.f32 %v675, 1.442695
        %v682 = vpow.pop %v681
        %v683 = vmul.f32 %v676, 1.442695
        %v684 = vpow.pop %v683
        %v685 = vmul.f32 %v665, %v678
        %v686 = vmul.f32 %v666, %v680
        %v687 = vmul.f32 %v667, %v682
        %v688 = vmul.f32 %v668, %v684
        %v689 = vsub.f32 1.0, %v685
        %v690 = vsub.f32 1.0, %v686
        %v691 = vsub.f32 1.0, %v687
        %v692 = vsub.f32 1.0, %v688
        %vm693 = vcmp.ge.f32.partialorder %v557, 0.0
        %vm694 = vcmp.ge.f32.partialorder %v558, 0.0
        %vm695 = vcmp.ge.f32.partialorder %v559, 0.0
        %vm696 = vcmp.ge.f32.partialorder %v560, 0.0
        %v697 = vsub.f32 0.0, %v689
        %v698 = vsub.f32 0.0, %v690
        %v699 = vsub.f32 0.0, %v691
        %v700 = vsub.f32 0.0, %v692
        %v701 = vsel %vm693, %v689, %v697
        %v702 = vsel %vm694, %v690, %v698
        %v703 = vsel %vm695, %v691, %v699
        %v704 = vsel %vm696, %v692, %v700
        %v705 = vmul.f32 %v546, 0.5
        %v706 = vmul.f32 %v549, 0.5
        %v707 = vmul.f32 %v552, 0.5
        %v708 = vmul.f32 %v555, 0.5
        %v709 = vadd.f32 %v701, 1.0
        %v710 = vadd.f32 %v702, 1.0
        %v711 = vadd.f32 %v703, 1.0
        %v712 = vadd.f32 %v704, 1.0
        %v713 = vmul.f32 %v705, %v709
        %v714 = vmul.f32 %v706, %v710
        %v715 = vmul.f32 %v707, %v711
        %v716 = vmul.f32 %v708, %v712
        %v717 = vadd.f32 %v713, %v333
        %v718 = vadd.f32 %v714, %v336
        %v719 = vadd.f32 %v715, %v339
        %v720 = vadd.f32 %v716, %v342
        %721 = vst [vmem:[%s191] sm:$0xff] %v717
        %722 = vst [vmem:[%s191 + $0x8] sm:$0xff] %v718
        %723 = vst [vmem:[%s191 + $0x10] sm:$0xff] %v719
        %724 = vst [vmem:[%s191 + $0x18] sm:$0xff] %v720
        %s725 = sand.u32 %s115, 1
        %s726 = scalar_lea.sflag [#allocation3], %s725
        %s727 = sand.u32 %s115, 1
        %s728 = smul.addr %s727, 32
        %s729 = scalar_lea.vmem [#allocation2], %s728
        // Predicated region
        $region37: #{tpu_custom_call.1} parent=35 // pred_check
          %p730 = pneg %p125
        $region38: #{tpu_custom_call.1} parent=35 // pred_check_branch
          %732 = sbr.rel (%p730) target = $region40
        $region39: #{tpu_custom_call.1} parent=35 // pred_region
          %734 = vsyncadd %s726, 0
          %s735 = smul.addr %s18, 8
          %s736 = scalar_lea.hbm %s4, %s735
          %s737 = sshll.u32 %s729, 4
          %s738 = int_to_ptr.vmem [resolvable:$true] %s737
          %s739 = sshll.u32 %s736, 4
          %s740 = int_to_ptr.hbm [resolvable:$true] %s739
          %745 = dma.vmem_to_hbm [thread:$0]  %s738, 512, %s740, %s726, 128, 256, 8
        $region40: #{tpu_custom_call.1} parent=35 // pred_fallthru
          _
      $region36: #{tpu_custom_call.1} parent=5 // pred_fallthru
        _
      %p746 = scmp.le.s32.totalorder 2, %s13
      // Predicated region
      $region41: #{tpu_custom_call.1} parent=5 // pred_check
        %p747 = pneg %p746
      $region42: #{tpu_custom_call.1} parent=5 // pred_check_branch
        %749 = sbr.rel (%p747) target = $region44
      $region43: #{tpu_custom_call.1} parent=5 // pred_region
        %s750 = ssub.s32 %s13, 2
        // Predicated region
        $region45: #{tpu_custom_call.1} parent=43 // pred_check
          %p751 = pneg %p131
        $region46: #{tpu_custom_call.1} parent=43 // pred_check_branch
          %753 = sbr.rel (%p751) target = $region48
        $region47: #{tpu_custom_call.1} parent=43 // pred_region
          %s754 = sand.u32 %s116, 1
          %s755 = scalar_lea.sflag [#allocation3], %s754
          %s756 = sand.u32 %s116, 1
          %s757 = smul.addr %s756, 32
          %s758 = scalar_lea.vmem [#allocation2], %s757
          %760 = dma.done %s755, 512
        $region48: #{tpu_custom_call.1} parent=43 // pred_fallthru
          _
      $region44: #{tpu_custom_call.1} parent=5 // pred_fallthru
        _
    $region6: #{tpu_custom_call.1} parent=1 // loop_footer
      %s17 = sadd.s32 1, %s13
    $region7: #{tpu_custom_call.1} parent=1 // loop_footer_branch
      %12 = sbr.rel target = $region3
    $region8: #{tpu_custom_call.1} parent=1 // loop_exit
      _
    %761 = vsyncpa [#allocation3], 1
    %s762 = scalar_lea.sflag [#allocation3], 1
    %763 = vsyncpa %s762, 1

</llo_original>
